<compile_context>
chip_gen: v5e
topology: v5e:2x2
jax: 0.10.0
libtpu: 0.0.40
codegen_flags: <defaults>
</compile_context>

<pallas_src>
import functools

import jax
import jax.numpy as jnp
import numpy as np
from jax.experimental import pallas as pl
from jax.experimental.pallas import tpu as pltpu


_FULLSPACE_ACTS = ('softmax_dim', 'exp_dim')


def _make_feature_map_kernel(activation: str, eps: float, D: int):
    """Builds the kernel for one (head, batch, seq-tile) grid step.

    Refs seen by the kernel:
      x_ref : (tl, D)    x.dtype   one head's rows for this sequence tile
      w0_ref: (D, Ep)    bf16      per-head down-projection (E zero-padded to Ep)
      w1_ref: (Ep, D)    bf16      per-head up-projection
      b0_ref: (1, Ep)    f32
      b1_ref: (1, D)     f32
      o_ref : (tl, Dout) x.dtype   Dout = 2*D for fullspace activations, else D
    """

    def kernel(x_ref, w0_ref, w1_ref, b0_ref, b1_ref, o_ref):
        x = x_ref[...]
        xf = x.astype(jnp.float32)

        # ---- bottleneck MLP (f32 accumulation) + skip connection ----
        h = jnp.dot(x, w0_ref[...], preferred_element_type=jnp.float32)
        h = jnp.maximum(h + b0_ref[...], 0.0)                     # bias + ReLU, f32
        y = jnp.dot(h.astype(w1_ref.dtype), w1_ref[...],
                    preferred_element_type=jnp.float32)
        y = y + b1_ref[...] + xf                                  # bias + skip, f32

        # ---- fused FeatureMap final activation (epilogue) ----
        if activation == 'softmax_dim':            # cat([softmax(y), softmax(-y)])
            mx = jnp.max(y, axis=-1, keepdims=True)
            mn = jnp.min(y, axis=-1, keepdims=True)
            e_pos = jnp.exp(y - mx)
            e_neg = jnp.exp(mn - y)                # == exp(-y - max(-y))
            p_pos = e_pos / jnp.sum(e_pos, axis=-1, keepdims=True)
            p_neg = e_neg / jnp.sum(e_neg, axis=-1, keepdims=True)
            o_ref[:, :D] = jnp.maximum(p_pos, eps).astype(o_ref.dtype)
            o_ref[:, D:] = jnp.maximum(p_neg, eps).astype(o_ref.dtype)
        elif activation == 'softmax_dim_halfspace':
            mx = jnp.max(y, axis=-1, keepdims=True)
            e_pos = jnp.exp(y - mx)
            p_pos = e_pos / jnp.sum(e_pos, axis=-1, keepdims=True)
            o_ref[...] = jnp.maximum(p_pos, eps).astype(o_ref.dtype)
        elif activation == 'exp_dim':              # cat([exp(y-max), exp(min-y)])
            mx = jnp.max(y, axis=-1, keepdims=True)
            mn = jnp.min(y, axis=-1, keepdims=True)
            o_ref[:, :D] = jnp.maximum(jnp.exp(y - mx), eps).astype(o_ref.dtype)
            o_ref[:, D:] = jnp.maximum(jnp.exp(mn - y), eps).astype(o_ref.dtype)
        elif activation == 'exp_dim_halfspace':
            mx = jnp.max(y, axis=-1, keepdims=True)
            o_ref[...] = jnp.maximum(jnp.exp(y - mx), eps).astype(o_ref.dtype)
        elif activation == 'pos_elu':              # (1 + elu(y)).clamp(min=eps)
            o_ref[...] = jnp.maximum(
                jnp.where(y > 0, y + 1.0, jnp.exp(y)), eps).astype(o_ref.dtype)
        elif activation == 'relu':                 # relu(y).clamp(min=eps)
            o_ref[...] = jnp.maximum(y, eps).astype(o_ref.dtype)
        elif activation == 'none':                 # MLP + skip only
            o_ref[...] = y.astype(o_ref.dtype)
        else:
            raise NotImplementedError(activation)

    return kernel


def pack_feature_map_params(layer0, layer1, bias0, bias1, *, stream_dtype=jnp.bfloat16):
    """One-time (init-time) parameter packing — hoisted out of the per-call path.

    layer0: (H, D, E), layer1: (H, E, F), bias0: (1, H, 1, E), bias1: (1, H, 1, F).
    The hidden width E is zero-padded up to a multiple of 128 lanes; padded
    hidden channels contribute exactly 0 (zero w0 cols, zero b0, zero w1 rows).
    """
    H, D, E = layer0.shape
    _, Ew, F = layer1.shape
    assert Ew == E and F == D, "skip connection requires head_dim == feature_dim"
    Ep = ((E + 127) // 128) * 128

    w0 = layer0.astype(stream_dtype)                       # (H, D, E)
    w1 = layer1.astype(stream_dtype)                       # (H, E, D)
    b0 = bias0.reshape(H, 1, E).astype(jnp.float32)
    b1 = bias1.reshape(H, 1, F).astype(jnp.float32)
    if Ep != E:
        w0 = jnp.pad(w0, ((0, 0), (0, 0), (0, Ep - E)))
        w1 = jnp.pad(w1, ((0, 0), (0, Ep - E), (0, 0)))
        b0 = jnp.pad(b0, ((0, 0), (0, 0), (0, Ep - E)))
    return {'w0': w0, 'w1': w1, 'b0': b0, 'b1': b1}


def _choose_seq_tile(L, target, sub=16):
    """Sequence-tile length: either the full L, or the largest multiple of `sub`
    (<= target) that divides L, so each grid step moves enough bytes to amortize
    the ~0.35us fixed per-step pipeline overhead."""
    if L <= target:
        return L
    t = (target // sub) * sub
    while t >= sub:
        if L % t == 0:
            return t
        t -= sub
    return L          # awkward L: a full-seq block is always a legal block shape


def feature_map_forward(x, w0, w1, b0, b1, *, activation='softmax_dim',
                        eps=1e-12, seq_tile_target=2048):
    """Fused lolcats FeatureMap forward: activation(mlp(x) + x).

    x: (B, H, L, D) in its NATIVE layout (no wrapper transposes).
    w0/w1/b0/b1: packed per-head params from pack_feature_map_params.
    Returns (B, H, L, 2*D) for fullspace activations, else (B, H, L, D).
    """
    B, H, L, D = x.shape
    Hw, Dw, Ep = w0.shape
    assert (Hw, Dw) == (H, D) and w1.shape == (H, Ep, D)
    Dout = 2 * D if activation in _FULLSPACE_ACTS else D

    tl = _choose_seq_tile(L, seq_tile_target)
    n_l = L // tl
    assert n_l * tl == L

    # Double-buffered x/out blocks + resident per-head weights + f32 temporaries.
    itm = jnp.dtype(x.dtype).itemsize
    w_itm = jnp.dtype(w0.dtype).itemsize
    est = (2 * (tl * D * itm + tl * Dout * itm)
           + 2 * (2 * D * Ep * w_itm + (Ep + D) * 4)
           + tl * (Ep + 5 * D) * 4 + (2 << 20))
    vmem_limit = int(min(max(est, 32 << 20), 64 << 20))

    kernel = _make_feature_map_kernel(activation, eps, D)

    return pl.pallas_call(
        kernel,
        out_shape=jax.ShapeDtypeStruct((B, H, L, Dout), x.dtype),
        grid_spec=pltpu.PrefetchScalarGridSpec(
            num_scalar_prefetch=0,
            # Head is the slowest grid axis, so the per-head weight/bias block
            # index is constant across all inner (batch, seq-tile) steps and the
            # blocks stay resident in VMEM (Pallas skips re-fetching unchanged
            # block indices).
            grid=(H, B, n_l),
            in_specs=[
                pl.BlockSpec((None, None, tl, D), lambda h, b, l: (b, h, l, 0)),
                pl.BlockSpec((None, D, Ep),       lambda h, b, l: (h, 0, 0)),
                pl.BlockSpec((None, Ep, D),       lambda h, b, l: (h, 0, 0)),
                pl.BlockSpec((None, 1, Ep),       lambda h, b, l: (h, 0, 0)),
                pl.BlockSpec((None, 1, D),        lambda h, b, l: (h, 0, 0)),
            ],
            out_specs=pl.BlockSpec((None, None, tl, Dout),
                                   lambda h, b, l: (b, h, l, 0)),
        ),
        compiler_params=pltpu.CompilerParams(
            dimension_semantics=("parallel", "parallel", "parallel"),
            vmem_limit_bytes=vmem_limit),
    )(x, w0, w1, b0, b1)


# ----------------------------- pure-JAX reference ----------------------------

def _activation_reference(y, activation, eps):
    if activation == 'softmax_dim':
        return jnp.maximum(jnp.concatenate(
            [jax.nn.softmax(y, axis=-1), jax.nn.softmax(-y, axis=-1)], axis=-1), eps)
    if activation == 'softmax_dim_halfspace':
        return jnp.maximum(jax.nn.softmax(y, axis=-1), eps)
    if activation == 'exp_dim':
        mx = jnp.max(y, axis=-1, keepdims=True)
        mn = jnp.min(y, axis=-1, keepdims=True)
        return jnp.maximum(jnp.concatenate(
            [jnp.exp(y - mx), jnp.exp(mn - y)], axis=-1), eps)
    if activation == 'exp_dim_halfspace':
        return jnp.maximum(jnp.exp(y - jnp.max(y, axis=-1, keepdims=True)), eps)
    if activation == 'pos_elu':
        return jnp.maximum(1.0 + jax.nn.elu(y), eps)
    if activation == 'relu':
        return jnp.maximum(jax.nn.relu(y), eps)
    if activation == 'none':
        return y
    raise NotImplementedError(activation)


def _reference(x, layer0, layer1, bias0, bias1, activation='softmax_dim', eps=1e-12):
    xf = x.astype(jnp.float32)
    h = jnp.einsum('hde,bhld->bhle', layer0.astype(jnp.float32), xf) \
        + bias0.astype(jnp.float32)
    h = jax.nn.relu(h)
    y = jnp.einsum('hef,bhle->bhlf', layer1.astype(jnp.float32), h) \
        + bias1.astype(jnp.float32)
    return _activation_reference(xf + y, activation, eps)


def _kaiming_uniform(key, shape, dtype=jnp.float32):
    # matches nn.init.kaiming_uniform_ default: bound = sqrt(6 / fan_in),
    # fan_in = second-to-last dim for >= 2-D tensors.
    fan_in = shape[-2] if len(shape) >= 2 else shape[-1]
    bound = float(np.sqrt(6.0 / max(fan_in, 1)))
    return jax.random.uniform(key, shape, dtype=dtype, minval=-bound, maxval=bound)


if __name__ == "__main__":
    # Small demo shapes: batch=2, heads=4, seq=16, head_dim=feature_dim=32, hidden=16.
    B, H, L, D = 2, 4, 16, 32
    E = 16

    key = jax.random.PRNGKey(0)
    kx, k0, k1, kb0, kb1 = jax.random.split(key, 5)

    x = jax.random.normal(kx, (B, H, L, D), dtype=jnp.float32).astype(jnp.bfloat16)
    layer0 = _kaiming_uniform(k0, (H, D, E)).astype(jnp.bfloat16)
    layer1 = _kaiming_uniform(k1, (H, E, D)).astype(jnp.bfloat16)
    bias0 = _kaiming_uniform(kb0, (1, H, 1, E))
    bias1 = _kaiming_uniform(kb1, (1, H, 1, D))

    # Parameter packing is done ONCE here (adapter init time), not inside the
    # jitted per-call forward (review: hoist block-diag/packing out of the call).
    packed = jax.tree_util.tree_map(
        jax.block_until_ready,
        pack_feature_map_params(layer0, layer1, bias0, bias1))

    for act in ('softmax_dim', 'relu'):
        fwd = jax.jit(functools.partial(feature_map_forward, activation=act))
        out = jax.block_until_ready(
            fwd(x, packed['w0'], packed['w1'], packed['b0'], packed['b1']))
        ref = _reference(x, layer0, layer1, bias0, bias1, activation=act)
        # bf16 streaming of x / weights / hidden tile vs. an all-f32 reference.
        np.testing.assert_allclose(np.asarray(out, dtype=np.float32),
                                   np.asarray(ref, dtype=np.float32),
                                   rtol=5e-2, atol=2e-2)
    print("KERNEL_OK")
</pallas_src>

<mosaic_0001>
module attributes {stable_mosaic.version = 11 : i64} {
  func.func @kernel(%arg0: i32, %arg1: i32, %arg2: i32, %arg3: memref<1x1x16x32xbf16, #tpu.memory_space<vmem>>, %arg4: memref<1x32x128xbf16, #tpu.memory_space<vmem>>, %arg5: memref<1x128x32xbf16, #tpu.memory_space<vmem>>, %arg6: memref<1x1x128xf32, #tpu.memory_space<vmem>>, %arg7: memref<1x1x32xf32, #tpu.memory_space<vmem>>, %arg8: memref<1x1x16x64xbf16, #tpu.memory_space<vmem>>) attributes {dimension_semantics = [#tpu.dimension_semantics<parallel>, #tpu.dimension_semantics<parallel>, #tpu.dimension_semantics<parallel>], iteration_bounds = array<i64: 4, 2, 1>, scalar_prefetch = 0 : i64, scratch_operands = 0 : i64, tpu.core_type = #tpu.core_type<tc>, window_params = [{transform_indices = @transform_0, window_bounds = array<i64: 1, 1, 16, 32>}, {transform_indices = @transform_1, window_bounds = array<i64: 1, 32, 128>}, {transform_indices = @transform_2, window_bounds = array<i64: 1, 128, 32>}, {transform_indices = @transform_3, window_bounds = array<i64: 1, 1, 128>}, {transform_indices = @transform_4, window_bounds = array<i64: 1, 1, 32>}, {transform_indices = @transform_5, window_bounds = array<i64: 1, 1, 16, 64>}]} {
    %c0 = arith.constant 0 : index
    %c0_0 = arith.constant 0 : index
    %c0_1 = arith.constant 0 : index
    %c0_2 = arith.constant 0 : index
    %0 = vector.load %arg3[%c0, %c0_0, %c0_1, %c0_2] : memref<1x1x16x32xbf16, #tpu.memory_space<vmem>>, vector<1x1x16x32xbf16>
    %1 = vector.shape_cast %0 : vector<1x1x16x32xbf16> to vector<16x32xbf16>
    %2 = arith.extf %1 : vector<16x32xbf16> to vector<16x32xf32>
    %c0_3 = arith.constant 0 : index
    %c0_4 = arith.constant 0 : index
    %c0_5 = arith.constant 0 : index
    %3 = vector.load %arg4[%c0_3, %c0_4, %c0_5] : memref<1x32x128xbf16, #tpu.memory_space<vmem>>, vector<1x32x128xbf16>
    %4 = vector.shape_cast %3 : vector<1x32x128xbf16> to vector<32x128xbf16>
    %cst = arith.constant dense<0.000000e+00> : vector<16x128xf32>
    %5 = tpu.matmul %1, %4, %cst {dimension_numbers = #tpu.dot_dimension_numbers<[1], [0], [0], [1], [0, 0, 1, 1], [], []>} : vector<16x32xbf16>, vector<32x128xbf16>, vector<16x128xf32> -> vector<16x128xf32>
    %c0_6 = arith.constant 0 : index
    %c0_7 = arith.constant 0 : index
    %c0_8 = arith.constant 0 : index
    %6 = vector.load %arg6[%c0_6, %c0_7, %c0_8] : memref<1x1x128xf32, #tpu.memory_space<vmem>>, vector<1x1x128xf32>
    %7 = vector.shape_cast %6 : vector<1x1x128xf32> to vector<1x128xf32>
    %8 = vector.broadcast %7 : vector<1x128xf32> to vector<16x128xf32>
    %9 = arith.addf %5, %8 : vector<16x128xf32>
    %cst_9 = arith.constant 0.000000e+00 : f32
    %10 = vector.broadcast %cst_9 : f32 to vector<16x128xf32>
    %11 = arith.maximumf %9, %10 : vector<16x128xf32>
    %12 = arith.truncf %11 : vector<16x128xf32> to vector<16x128xbf16>
    %c0_10 = arith.constant 0 : index
    %c0_11 = arith.constant 0 : index
    %c0_12 = arith.constant 0 : index
    %13 = vector.load %arg5[%c0_10, %c0_11, %c0_12] : memref<1x128x32xbf16, #tpu.memory_space<vmem>>, vector<1x128x32xbf16>
    %14 = vector.shape_cast %13 : vector<1x128x32xbf16> to vector<128x32xbf16>
    %cst_13 = arith.constant dense<0.000000e+00> : vector<16x32xf32>
    %15 = tpu.matmul %12, %14, %cst_13 {dimension_numbers = #tpu.dot_dimension_numbers<[1], [0], [0], [1], [0, 0, 1, 1], [], []>} : vector<16x128xbf16>, vector<128x32xbf16>, vector<16x32xf32> -> vector<16x32xf32>
    %c0_14 = arith.constant 0 : index
    %c0_15 = arith.constant 0 : index
    %c0_16 = arith.constant 0 : index
    %16 = vector.load %arg7[%c0_14, %c0_15, %c0_16] : memref<1x1x32xf32, #tpu.memory_space<vmem>>, vector<1x1x32xf32>
    %17 = vector.shape_cast %16 : vector<1x1x32xf32> to vector<1x32xf32>
    %18 = vector.broadcast %17 : vector<1x32xf32> to vector<16x32xf32>
    %19 = arith.addf %15, %18 : vector<16x32xf32>
    %20 = arith.addf %19, %2 : vector<16x32xf32>
    %cst_17 = arith.constant dense<0xFF800000> : vector<16xf32>
    %21 = vector.multi_reduction <maximumf>, %20, %cst_17 [1] : vector<16x32xf32> to vector<16xf32>
    %22 = vector.shape_cast %21 : vector<16xf32> to vector<16x1xf32>
    %cst_18 = arith.constant dense<0x7F800000> : vector<16xf32>
    %23 = vector.multi_reduction <minimumf>, %20, %cst_18 [1] : vector<16x32xf32> to vector<16xf32>
    %24 = vector.shape_cast %23 : vector<16xf32> to vector<16x1xf32>
    %25 = vector.broadcast %22 : vector<16x1xf32> to vector<16x32xf32>
    %26 = arith.subf %20, %25 : vector<16x32xf32>
    %27 = math.exp %26 : vector<16x32xf32>
    %28 = vector.broadcast %24 : vector<16x1xf32> to vector<16x32xf32>
    %29 = arith.subf %28, %20 : vector<16x32xf32>
    %30 = math.exp %29 : vector<16x32xf32>
    %cst_19 = arith.constant dense<0.000000e+00> : vector<16xf32>
    %31 = vector.multi_reduction <add>, %27, %cst_19 [1] : vector<16x32xf32> to vector<16xf32>
    %32 = vector.shape_cast %31 : vector<16xf32> to vector<16x1xf32>
    %33 = vector.broadcast %32 : vector<16x1xf32> to vector<16x32xf32>
    %34 = arith.divf %27, %33 : vector<16x32xf32>
    %cst_20 = arith.constant dense<0.000000e+00> : vector<16xf32>
    %35 = vector.multi_reduction <add>, %30, %cst_20 [1] : vector<16x32xf32> to vector<16xf32>
    %36 = vector.shape_cast %35 : vector<16xf32> to vector<16x1xf32>
    %37 = vector.broadcast %36 : vector<16x1xf32> to vector<16x32xf32>
    %38 = arith.divf %30, %37 : vector<16x32xf32>
    %cst_21 = arith.constant 9.99999996E-13 : f32
    %39 = vector.broadcast %cst_21 : f32 to vector<16x32xf32>
    %40 = arith.maximumf %34, %39 : vector<16x32xf32>
    %41 = arith.truncf %40 : vector<16x32xf32> to vector<16x32xbf16>
    %c0_22 = arith.constant 0 : index
    %c0_23 = arith.constant 0 : index
    %c0_24 = arith.constant 0 : index
    %c0_25 = arith.constant 0 : index
    %42 = vector.load %arg8[%c0_22, %c0_23, %c0_24, %c0_25] : memref<1x1x16x64xbf16, #tpu.memory_space<vmem>>, vector<1x1x16x32xbf16>
    %43 = vector.shape_cast %42 : vector<1x1x16x32xbf16> to vector<16x32xbf16>
    %44 = vector.shape_cast %41 : vector<16x32xbf16> to vector<1x1x16x32xbf16>
    tpu.vector_store %arg8[%c0_22, %c0_23, %c0_24, %c0_25], %44 {strides = array<i32>} : memref<1x1x16x64xbf16, #tpu.memory_space<vmem>>, vector<1x1x16x32xbf16>,
    %cst_26 = arith.constant 9.99999996E-13 : f32
    %45 = vector.broadcast %cst_26 : f32 to vector<16x32xf32>
    %46 = arith.maximumf %38, %45 : vector<16x32xf32>
    %47 = arith.truncf %46 : vector<16x32xf32> to vector<16x32xbf16>
    %c0_27 = arith.constant 0 : index
    %c0_28 = arith.constant 0 : index
    %c0_29 = arith.constant 0 : index
    %c32 = arith.constant 32 : index
    %48 = vector.load %arg8[%c0_27, %c0_28, %c0_29, %c32] : memref<1x1x16x64xbf16, #tpu.memory_space<vmem>>, vector<1x1x16x32xbf16>
    %49 = vector.shape_cast %48 : vector<1x1x16x32xbf16> to vector<16x32xbf16>
    %50 = vector.shape_cast %47 : vector<16x32xbf16> to vector<1x1x16x32xbf16>
    tpu.vector_store %arg8[%c0_27, %c0_28, %c0_29, %c32], %50 {strides = array<i32>} : memref<1x1x16x64xbf16, #tpu.memory_space<vmem>>, vector<1x1x16x32xbf16>,
    return
  }
  func.func @transform_0(%arg0: i32, %arg1: i32, %arg2: i32) -> (i32, i32, i32, i32) {
    %c0_i32 = arith.constant 0 : i32
    %c0_i32_0 = arith.constant 0 : i32
    return %arg1, %arg0, %arg2, %c0_i32 : i32, i32, i32, i32
  }
  func.func @transform_1(%arg0: i32, %arg1: i32, %arg2: i32) -> (i32, i32, i32) {
    %c0_i32 = arith.constant 0 : i32
    %c0_i32_0 = arith.constant 0 : i32
    %c0_i32_1 = arith.constant 0 : i32
    return %arg0, %c0_i32, %c0_i32_0 : i32, i32, i32
  }
  func.func @transform_2(%arg0: i32, %arg1: i32, %arg2: i32) -> (i32, i32, i32) {
    %c0_i32 = arith.constant 0 : i32
    %c0_i32_0 = arith.constant 0 : i32
    %c0_i32_1 = arith.constant 0 : i32
    return %arg0, %c0_i32, %c0_i32_0 : i32, i32, i32
  }
  func.func @transform_3(%arg0: i32, %arg1: i32, %arg2: i32) -> (i32, i32, i32) {
    %c0_i32 = arith.constant 0 : i32
    %c0_i32_0 = arith.constant 0 : i32
    %c0_i32_1 = arith.constant 0 : i32
    return %arg0, %c0_i32, %c0_i32_0 : i32, i32, i32
  }
  func.func @transform_4(%arg0: i32, %arg1: i32, %arg2: i32) -> (i32, i32, i32) {
    %c0_i32 = arith.constant 0 : i32
    %c0_i32_0 = arith.constant 0 : i32
    %c0_i32_1 = arith.constant 0 : i32
    return %arg0, %c0_i32, %c0_i32_0 : i32, i32, i32
  }
  func.func @transform_5(%arg0: i32, %arg1: i32, %arg2: i32) -> (i32, i32, i32, i32) {
    %c0_i32 = arith.constant 0 : i32
    %c0_i32_0 = arith.constant 0 : i32
    return %arg1, %arg0, %arg2, %c0_i32 : i32, i32, i32, i32
  }
}

</mosaic_0001>

<llo_original>
// kernel: feature_map_forward.1
$region0: #{feature_map_forward.1}
  #allocation0 [shape = 'u32[]', space=smem, size = 0x4, offset = 0x4, fixed_abs, tag = 'smem constant byte address 0x4 - core index']
  #allocation1 [shape = 'u32[72,128]{1,0:T(1,128)}', space=vmem, size = 0x9000, scoped, tag = 'internal scratch']
  %s0 = inlined_call_operand.vmem [shape: bf16[2,4,16,32], index: 0, kind: input, shape index: {}]
  %s1 = inlined_call_operand.vmem [shape: bf16[4,32,128], index: 1, kind: input, shape index: {}]
  %s2 = inlined_call_operand.vmem [shape: bf16[4,128,32], index: 2, kind: input, shape index: {}]
  %s3 = inlined_call_operand.vmem [shape: f32[4,1,128], index: 3, kind: input, shape index: {}]
  %s4 = inlined_call_operand.vmem [shape: f32[4,1,32], index: 4, kind: input, shape index: {}]
  %s5 = inlined_call_operand.hbm [shape: bf16[2,4,16,64], index: 5, kind: output, shape index: {}]
  %s6 = sld [smem:[#allocation0]]
  $region53: #{feature_map_forward.1} parent=0
    _
  %s8 = ssub.s32 1, %s6
  %s9 = scalar_select 0, %s8, %s6
  $region1: #{feature_map_forward.1} parent=0
    #allocation2 [shape = 'u8[8192]{0}', space=vmem, size = 0x2000, scoped, tag = 'output window, operand 0']
    #allocation3 [shape = 's32[2]{0}', space=sflag, size = 0x8, scoped, tag = 'scoped memory for feature_map_forward.1']
    %10 = vsyncpa [#allocation3], 0
    %s11 = scalar_lea.sflag [#allocation3], 1
    %12 = vsyncpa %s11, 0
    loop: start=0, step=1, limit=10
    $region2: #{feature_map_forward.1} parent=1 // loop_pre_header
      _
    $region3: #{feature_map_forward.1} parent=1 // loop_header
      %s14 = sphi 0, %s18
      %p15 = scmp.ge.s32.totalorder %s14, 10
      %s21 = sphi 0, %s40
      %s22 = sphi 0, %s36
      %s23 = sphi 0, %s32
      %s24 = sphi 0, %s21
      %s25 = sphi 0, %s22
      %s26 = sphi 0, %s23
      %s27 = sphi 0, %s24
      %s28 = sphi 0, %s25
      %s29 = sphi 0, %s26
      %s47 = sphi 0, %s49
      %s50 = sphi 0, %s47
      %s51 = sphi 0, %s50
      %s67 = sphi 0, %s51
      %s73 = sphi 0, %s75
      %s76 = sphi 0, %s73
      %s77 = sphi 0, %s76
      %s93 = sphi 0, %s77
      %s99 = sphi 0, %s101
      %s102 = sphi 0, %s99
      %s103 = sphi 0, %s102
      %s119 = sphi 0, %s103
      %s125 = sphi 0, %s127
      %s128 = sphi 0, %s125
      %s129 = sphi 0, %s128
      %s145 = sphi 0, %s129
      %s151 = sphi 0, %s153
      %s154 = sphi 0, %s151
      %s155 = sphi 0, %s154
      %s171 = sphi 0, %s155
      %s181 = sphi 0, %s183
      %s184 = sphi 0, %s181
      %s185 = sphi 0, %s184
      %s201 = sphi 0, %s185
    $region4: #{feature_map_forward.1} parent=1 // loop_header_branch
      %17 = sbr.rel (%p15) target = $region8
    $region5: #{feature_map_forward.1} parent=1 // loop_body
      %s19 = ssub.s32 %s14, 1
      %s20 = ssub.s32 %s14, 2
      %s30 = sadd.s32 1, %s23
      %p31 = scmp.ge.s32.totalorder %s30, 1
      %s32 = scalar_select %p31, 0, %s30
      %s33 = sadd.s32 1, %s22
      %s34 = scalar_select %p31, %s33, %s22
      %p35 = scmp.ge.s32.totalorder %s34, 2
      %s36 = scalar_select %p35, 0, %s34
      %s37 = sadd.s32 1, %s21
      %s38 = scalar_select %p35, %s37, %s21
      %p39 = scmp.ge.s32.totalorder %s38, 4
      %s40 = scalar_select %p39, 0, %s38
      %s41 = ssub.s32 %s22, %s36
      %s42 = ssub.s32 %s21, %s40
      %s43 = sor.u32 %s41, %s42
      %s44 = ssub.s32 %s23, %s32
      %s45 = sor.u32 %s43, %s44
      %p46 = scmp.eq.s32.totalorder %s45, 0
      %s48 = sadd.s32 %s47, 1
      %s49 = scalar_select %p46, %s47, %s48
      %p52 = pneg %p46
      %p53 = scmp.eq.s32.totalorder %s14, 7
      %p54 = por %p52, %p53
      %p55 = scmp.ne.s32.totalorder %s47, %s50
      %p56 = scmp.eq.s32.totalorder %s14, 0
      %p57 = por %p55, %p56
      %p58 = scmp.ne.s32.totalorder %s47, %s50
      %p59 = scmp.eq.s32.totalorder %s19, 7
      %p60 = por %p58, %p59
      %p61 = scmp.ne.s32.totalorder %s50, %s51
      %p62 = scmp.eq.s32.totalorder %s19, 0
      %p63 = por %p61, %p62
      %p64 = scmp.ne.s32.totalorder %s50, %s51
      %p65 = scmp.eq.s32.totalorder %s20, 7
      %p66 = por %p64, %p65
      %p68 = scmp.ne.s32.totalorder %s51, %s67
      %p69 = scmp.eq.s32.totalorder %s20, 0
      %p70 = por %p68, %p69
      %s71 = ssub.s32 %s21, %s40
      %p72 = scmp.eq.s32.totalorder %s71, 0
      %s74 = sadd.s32 %s73, 1
      %s75 = scalar_select %p72, %s73, %s74
      %p78 = pneg %p72
      %p79 = scmp.eq.s32.totalorder %s14, 7
      %p80 = por %p78, %p79
      %p81 = scmp.ne.s32.totalorder %s73, %s76
      %p82 = scmp.eq.s32.totalorder %s14, 0
      %p83 = por %p81, %p82
      %p84 = scmp.ne.s32.totalorder %s73, %s76
      %p85 = scmp.eq.s32.totalorder %s19, 7
      %p86 = por %p84, %p85
      %p87 = scmp.ne.s32.totalorder %s76, %s77
      %p88 = scmp.eq.s32.totalorder %s19, 0
      %p89 = por %p87, %p88
      %p90 = scmp.ne.s32.totalorder %s76, %s77
      %p91 = scmp.eq.s32.totalorder %s20, 7
      %p92 = por %p90, %p91
      %p94 = scmp.ne.s32.totalorder %s77, %s93
      %p95 = scmp.eq.s32.totalorder %s20, 0
      %p96 = por %p94, %p95
      %s97 = ssub.s32 %s21, %s40
      %p98 = scmp.eq.s32.totalorder %s97, 0
      %s100 = sadd.s32 %s99, 1
      %s101 = scalar_select %p98, %s99, %s100
      %p104 = pneg %p98
      %p105 = scmp.eq.s32.totalorder %s14, 7
      %p106 = por %p104, %p105
      %p107 = scmp.ne.s32.totalorder %s99, %s102
      %p108 = scmp.eq.s32.totalorder %s14, 0
      %p109 = por %p107, %p108
      %p110 = scmp.ne.s32.totalorder %s99, %s102
      %p111 = scmp.eq.s32.totalorder %s19, 7
      %p112 = por %p110, %p111
      %p113 = scmp.ne.s32.totalorder %s102, %s103
      %p114 = scmp.eq.s32.totalorder %s19, 0
      %p115 = por %p113, %p114
      %p116 = scmp.ne.s32.totalorder %s102, %s103
      %p117 = scmp.eq.s32.totalorder %s20, 7
      %p118 = por %p116, %p117
      %p120 = scmp.ne.s32.totalorder %s103, %s119
      %p121 = scmp.eq.s32.totalorder %s20, 0
      %p122 = por %p120, %p121
      %s123 = ssub.s32 %s21, %s40
      %p124 = scmp.eq.s32.totalorder %s123, 0
      %s126 = sadd.s32 %s125, 1
      %s127 = scalar_select %p124, %s125, %s126
      %p130 = pneg %p124
      %p131 = scmp.eq.s32.totalorder %s14, 7
      %p132 = por %p130, %p131
      %p133 = scmp.ne.s32.totalorder %s125, %s128
      %p134 = scmp.eq.s32.totalorder %s14, 0
      %p135 = por %p133, %p134
      %p136 = scmp.ne.s32.totalorder %s125, %s128
      %p137 = scmp.eq.s32.totalorder %s19, 7
      %p138 = por %p136, %p137
      %p139 = scmp.ne.s32.totalorder %s128, %s129
      %p140 = scmp.eq.s32.totalorder %s19, 0
      %p141 = por %p139, %p140
      %p142 = scmp.ne.s32.totalorder %s128, %s129
      %p143 = scmp.eq.s32.totalorder %s20, 7
      %p144 = por %p142, %p143
      %p146 = scmp.ne.s32.totalorder %s129, %s145
      %p147 = scmp.eq.s32.totalorder %s20, 0
      %p148 = por %p146, %p147
      %s149 = ssub.s32 %s21, %s40
      %p150 = scmp.eq.s32.totalorder %s149, 0
      %s152 = sadd.s32 %s151, 1
      %s153 = scalar_select %p150, %s151, %s152
      %p156 = pneg %p150
      %p157 = scmp.eq.s32.totalorder %s14, 7
      %p158 = por %p156, %p157
      %p159 = scmp.ne.s32.totalorder %s151, %s154
      %p160 = scmp.eq.s32.totalorder %s14, 0
      %p161 = por %p159, %p160
      %p162 = scmp.ne.s32.totalorder %s151, %s154
      %p163 = scmp.eq.s32.totalorder %s19, 7
      %p164 = por %p162, %p163
      %p165 = scmp.ne.s32.totalorder %s154, %s155
      %p166 = scmp.eq.s32.totalorder %s19, 0
      %p167 = por %p165, %p166
      %p168 = scmp.ne.s32.totalorder %s154, %s155
      %p169 = scmp.eq.s32.totalorder %s20, 7
      %p170 = por %p168, %p169
      %p172 = scmp.ne.s32.totalorder %s155, %s171
      %p173 = scmp.eq.s32.totalorder %s20, 0
      %p174 = por %p172, %p173
      %s175 = ssub.s32 %s22, %s36
      %s176 = ssub.s32 %s21, %s40
      %s177 = sor.u32 %s175, %s176
      %s178 = ssub.s32 %s23, %s32
      %s179 = sor.u32 %s177, %s178
      %p180 = scmp.eq.s32.totalorder %s179, 0
      %s182 = sadd.s32 %s181, 1
      %s183 = scalar_select %p180, %s181, %s182
      %p186 = pneg %p180
      %p187 = scmp.eq.s32.totalorder %s14, 7
      %p188 = por %p186, %p187
      %p189 = scmp.ne.s32.totalorder %s181, %s184
      %p190 = scmp.eq.s32.totalorder %s14, 0
      %p191 = por %p189, %p190
      %p192 = scmp.ne.s32.totalorder %s181, %s184
      %p193 = scmp.eq.s32.totalorder %s19, 7
      %p194 = por %p192, %p193
      %p195 = scmp.ne.s32.totalorder %s184, %s185
      %p196 = scmp.eq.s32.totalorder %s19, 0
      %p197 = por %p195, %p196
      %p198 = scmp.ne.s32.totalorder %s184, %s185
      %p199 = scmp.eq.s32.totalorder %s20, 7
      %p200 = por %p198, %p199
      %p202 = scmp.ne.s32.totalorder %s185, %s201
      %p203 = scmp.eq.s32.totalorder %s20, 0
      %p204 = por %p202, %p203
      %p205 = scmp.le.s32.totalorder 1, %s14
      %p206 = scmp.lt.s32.totalorder %s14, 9
      %p207 = pnand %p205, %p206
      %p208 = pneg %p207
      // Predicated region
      $region9: #{feature_map_forward.1} parent=5 // pred_check
        _
      $region10: #{feature_map_forward.1} parent=5 // pred_check_branch
        %210 = sbr.rel (%p207) target = $region12
      $region11: #{feature_map_forward.1} parent=5 // pred_region
        %s211 = ssub.s32 %s14, 1
      $region12: #{feature_map_forward.1} parent=5 // pred_fallthru
        _
      %p212 = scmp.lt.s32.totalorder %s14, 8
      // Predicated region
      $region13: #{feature_map_forward.1} parent=5 // pred_check
        %p213 = pneg %p212
      $region14: #{feature_map_forward.1} parent=5 // pred_check_branch
        %215 = sbr.rel (%p213) target = $region16
      $region15: #{feature_map_forward.1} parent=5 // pred_region
        // Predicated region
        $region17: #{feature_map_forward.1} parent=15 // pred_check
          %p216 = pneg %p57
        $region18: #{feature_map_forward.1} parent=15 // pred_check_branch
          %218 = sbr.rel (%p216) target = $region20
        $region19: #{feature_map_forward.1} parent=15 // pred_region
          %s219 = smul.u32 2, %s23
          %p220 = scmp.lt.s32.totalorder %s22, 1
          %s221 = scalar_select %p220, %s22, 1
          %p222 = scmp.lt.s32.totalorder %s21, 3
          %s223 = scalar_select %p222, %s21, 3
          %p224 = scmp.lt.s32.totalorder %s219, 1
          %s225 = scalar_select %p224, %s219, 1
          %s226 = smul.addr %s223, 2
          %s227 = sadd.s32 %s225, %s226
          %s228 = smul.addr %s221, 8
          %s229 = sadd.s32 %s227, %s228
          %s230 = smul.addr %s229, 4
          %s231 = scalar_lea.vmem %s0, %s230
          %s232 = smul.u32 2, %s23
        $region20: #{feature_map_forward.1} parent=15 // pred_fallthru
          _
        // Predicated region
        $region21: #{feature_map_forward.1} parent=15 // pred_check
          %p233 = pneg %p83
        $region22: #{feature_map_forward.1} parent=15 // pred_check_branch
          %235 = sbr.rel (%p233) target = $region24
        $region23: #{feature_map_forward.1} parent=15 // pred_region
          %p236 = scmp.lt.s32.totalorder %s21, 3
          %s237 = scalar_select %p236, %s21, 3
          %s238 = smul.addr %s237, 4
          %s239 = smul.addr %s238, 4
          %s240 = scalar_lea.vmem %s1, %s239
        $region24: #{feature_map_forward.1} parent=15 // pred_fallthru
          _
        // Predicated region
        $region25: #{feature_map_forward.1} parent=15 // pred_check
          %p241 = pneg %p109
        $region26: #{feature_map_forward.1} parent=15 // pred_check_branch
          %243 = sbr.rel (%p241) target = $region28
        $region27: #{feature_map_forward.1} parent=15 // pred_region
          %p244 = scmp.lt.s32.totalorder %s21, 3
          %s245 = scalar_select %p244, %s21, 3
          %s246 = smul.addr %s245, 16
          %s247 = smul.addr %s246, 4
          %s248 = scalar_lea.vmem %s2, %s247
        $region28: #{feature_map_forward.1} parent=15 // pred_fallthru
          _
        // Predicated region
        $region29: #{feature_map_forward.1} parent=15 // pred_check
          %p249 = pneg %p135
        $region30: #{feature_map_forward.1} parent=15 // pred_check_branch
          %251 = sbr.rel (%p249) target = $region32
        $region31: #{feature_map_forward.1} parent=15 // pred_region
          %p252 = scmp.lt.s32.totalorder %s21, 3
          %s253 = scalar_select %p252, %s21, 3
          %s254 = scalar_lea.vmem %s3, %s253
        $region32: #{feature_map_forward.1} parent=15 // pred_fallthru
          _
        // Predicated region
        $region33: #{feature_map_forward.1} parent=15 // pred_check
          %p255 = pneg %p161
        $region34: #{feature_map_forward.1} parent=15 // pred_check_branch
          %257 = sbr.rel (%p255) target = $region36
        $region35: #{feature_map_forward.1} parent=15 // pred_region
          %p258 = scmp.lt.s32.totalorder %s21, 3
          %s259 = scalar_select %p258, %s21, 3
          %s260 = scalar_lea.vmem %s4, %s259
        $region36: #{feature_map_forward.1} parent=15 // pred_fallthru
          _
      $region16: #{feature_map_forward.1} parent=5 // pred_fallthru
        _
      %p261 = scmp.le.s32.totalorder 1, %s14
      %p262 = scmp.lt.s32.totalorder %s14, 9
      %p263 = pnand %p261, %p262
      %p264 = pneg %p263
      // Predicated region
      $region37: #{feature_map_forward.1} parent=5 // pred_check
        _
      $region38: #{feature_map_forward.1} parent=5 // pred_check_branch
        %266 = sbr.rel (%p263) target = $region40
      $region39: #{feature_map_forward.1} parent=5 // pred_region
        %s267 = ssub.s32 %s14, 1
        %s268 = smul.u32 2, %s26
        %p269 = scmp.lt.s32.totalorder %s25, 1
        %s270 = scalar_select %p269, %s25, 1
        %p271 = scmp.lt.s32.totalorder %s24, 3
        %s272 = scalar_select %p271, %s24, 3
        %p273 = scmp.lt.s32.totalorder %s268, 1
        %s274 = scalar_select %p273, %s268, 1
        %s275 = smul.addr %s272, 2
        %s276 = sadd.s32 %s274, %s275
        %s277 = smul.addr %s270, 8
        %s278 = sadd.s32 %s276, %s277
        %s279 = smul.addr %s278, 4
        %s280 = scalar_lea.vmem %s0, %s279
        %p281 = pneg %p63
        %p282 = pneg %p60
        %p283 = scmp.lt.s32.totalorder %s24, 3
        %s284 = scalar_select %p283, %s24, 3
        %s285 = smul.addr %s284, 4
        %s286 = smul.addr %s285, 4
        %s287 = scalar_lea.vmem %s1, %s286
        %p288 = pneg %p89
        %p289 = pneg %p86
        %p290 = scmp.lt.s32.totalorder %s24, 3
        %s291 = scalar_select %p290, %s24, 3
        %s292 = smul.addr %s291, 16
        %s293 = smul.addr %s292, 4
        %s294 = scalar_lea.vmem %s2, %s293
        %p295 = pneg %p115
        %p296 = pneg %p112
        %p297 = scmp.lt.s32.totalorder %s24, 3
        %s298 = scalar_select %p297, %s24, 3
        %s299 = scalar_lea.vmem %s3, %s298
        %p300 = pneg %p141
        %p301 = pneg %p138
        %p302 = scmp.lt.s32.totalorder %s24, 3
        %s303 = scalar_select %p302, %s24, 3
        %s304 = scalar_lea.vmem %s4, %s303
        %p305 = pneg %p167
        %p306 = pneg %p164
        %p307 = pneg %p197
        %p308 = pneg %p194
        %s309 = sand.u32 %s184, 1
        %s310 = scalar_lea.sflag [#allocation3], %s309
        %s311 = sand.u32 %s184, 1
        %s312 = smul.addr %s311, 8
        %s313 = scalar_lea.vmem [#allocation2], %s312
        %s314 = smul.u32 2, %s26
        %p315 = scmp.lt.s32.totalorder %s25, 1
        %s316 = scalar_select %p315, %s25, 1
        %p317 = scmp.lt.s32.totalorder %s24, 3
        %s318 = scalar_select %p317, %s24, 3
        %p319 = scmp.lt.s32.totalorder %s314, 1
        %s320 = scalar_select %p319, %s314, 1
        %s321 = smul.addr %s318, 2
        %s322 = sadd.s32 %s320, %s321
        %s323 = smul.addr %s316, 8
        %s324 = sadd.s32 %s322, %s323
        %s325 = smul.addr %s324, 4
        %s326 = scalar_lea.vmem %s0, %s325
        %s327 = smul.u32 2, %s26
        %p328 = scmp.lt.s32.totalorder %s24, 3
        %s329 = scalar_select %p328, %s24, 3
        %s330 = smul.addr %s329, 4
        %s331 = smul.addr %s330, 4
        %s332 = scalar_lea.vmem %s1, %s331
        %p333 = scmp.lt.s32.totalorder %s24, 3
        %s334 = scalar_select %p333, %s24, 3
        %s335 = smul.addr %s334, 16
        %s336 = smul.addr %s335, 4
        %s337 = scalar_lea.vmem %s2, %s336
        %p338 = scmp.lt.s32.totalorder %s24, 3
        %s339 = scalar_select %p338, %s24, 3
        %s340 = scalar_lea.vmem %s3, %s339
        %p341 = scmp.lt.s32.totalorder %s24, 3
        %s342 = scalar_select %p341, %s24, 3
        %s343 = scalar_lea.vmem %s4, %s342
        %s344 = smul.u32 2, %s26
        %v346 = vld [vmem:[%s326] sm:$0xf]
        %v347 = vld [vmem:[%s326 + $0x4] sm:$0xf]
        %v348 = vunpack.c.l.bf16 %v346
        %v349 = vunpack.c.l.bf16 %v347
        %v350 = vld [vmem:[%s332] sm:$0xf]
        %v351 = vld [vmem:[%s332 + $0x4] sm:$0xf]
        %v352 = vld [vmem:[%s332 + $0x8] sm:$0xf]
        %v353 = vld [vmem:[%s332 + $0xc] sm:$0xf]
        %v354 = vld [vmem:[%s340] sm:$0x1]
        %v356 = vperm.slane %v354, 0
        %v360 = vunpack.c.l.b16 %v346
        %v361 = vunpack.c.l.b16 %v347
        %v362 = vpack.c.b16 %v361, %v360
        %v367 = vunpack.c.l.b16 %v350
        %v368 = vunpack.c.l.b16 %v351
        %v369 = vunpack.c.l.b16 %v352
        %v370 = vunpack.c.l.b16 %v353
        %v371 = vpack.c.b16 %v368, %v367
        %v372 = vpack.c.b16 %v370, %v369
        %vm375 = vcmask 261120
        %v377 = vsel %vm375, %v362, 0
        %379 = vmatpush.bf16.msra.mxu0 0
        %380 = vmatpush.bf16.msra.mxu0 0
        %381 = vmatpush.bf16.msra.mxu0 0
        %382 = vmatpush.bf16.msra.mxu0 0
        %383 = vmatpush.bf16.msra.mxu0 0
        %384 = vmatpush.bf16.msra.mxu0 0
        %385 = vmatpush.bf16.msra.mxu0 %v372
        %386 = vmatpush.bf16.msra.mxu0 %v371
        %387 = vmatmul.bf16.gmra.mxu0 %v377
        %v388 = vpop.f32.mrf.mxu0
        %v389 = vadd.f32 %v356, %v388
        %v390 = vpop.f32.mrf.mxu0
        %v391 = vadd.f32 %v356, %v390
        %392 = vdwg.mxu0
        %v393 = vmax.f32 %v389, 0.0
        %v394 = vmax.f32 %v391, 0.0
        %v395 = vpack.c.bf16 %v394, %v393
        %v396 = vld [vmem:[%s337] sm:$0xf]
        %v397 = vld [vmem:[%s337 + $0x4] sm:$0xf]
        %v398 = vld [vmem:[%s337 + $0x8] sm:$0xf]
        %v399 = vld [vmem:[%s337 + $0xc] sm:$0xf]
        %v400 = vld [vmem:[%s337 + $0x10] sm:$0xf]
        %v401 = vld [vmem:[%s337 + $0x14] sm:$0xf]
        %v402 = vld [vmem:[%s337 + $0x18] sm:$0xf]
        %v403 = vld [vmem:[%s337 + $0x1c] sm:$0xf]
        %v404 = vld [vmem:[%s337 + $0x20] sm:$0xf]
        %v405 = vld [vmem:[%s337 + $0x24] sm:$0xf]
        %v406 = vld [vmem:[%s337 + $0x28] sm:$0xf]
        %v407 = vld [vmem:[%s337 + $0x2c] sm:$0xf]
        %v408 = vld [vmem:[%s337 + $0x30] sm:$0xf]
        %v409 = vld [vmem:[%s337 + $0x34] sm:$0xf]
        %v410 = vld [vmem:[%s337 + $0x38] sm:$0xf]
        %v411 = vld [vmem:[%s337 + $0x3c] sm:$0xf]
        %v412 = vld [vmem:[%s343] sm:$0x1]
        %v414 = vperm.slane %v412, 0
        %v432 = vunpack.c.l.b16 %v396
        %v433 = vunpack.c.l.b16 %v397
        %v434 = vunpack.c.l.b16 %v398
        %v435 = vunpack.c.l.b16 %v399
        %v436 = vunpack.c.l.b16 %v400
        %v437 = vunpack.c.l.b16 %v401
        %v438 = vunpack.c.l.b16 %v402
        %v439 = vunpack.c.l.b16 %v403
        %v440 = vunpack.c.l.b16 %v404
        %v441 = vunpack.c.l.b16 %v405
        %v442 = vunpack.c.l.b16 %v406
        %v443 = vunpack.c.l.b16 %v407
        %v444 = vunpack.c.l.b16 %v408
        %v445 = vunpack.c.l.b16 %v409
        %v446 = vunpack.c.l.b16 %v410
        %v447 = vunpack.c.l.b16 %v411
        %v448 = vpack.c.b16 %v433, %v432
        %v449 = vpack.c.b16 %v435, %v434
        %v450 = vpack.c.b16 %v437, %v436
        %v451 = vpack.c.b16 %v439, %v438
        %v452 = vpack.c.b16 %v441, %v440
        %v453 = vpack.c.b16 %v443, %v442
        %v454 = vpack.c.b16 %v445, %v444
        %v455 = vpack.c.b16 %v447, %v446
        %464 = vmatpush.bf16.msra.mxu0 %v455
        %465 = vmatpush.bf16.msra.mxu0 %v454
        %466 = vmatpush.bf16.msra.mxu0 %v453
        %467 = vmatpush.bf16.msra.mxu0 %v452
        %468 = vmatpush.bf16.msra.mxu0 %v451
        %469 = vmatpush.bf16.msra.mxu0 %v450
        %470 = vmatpush.bf16.msra.mxu0 %v449
        %471 = vmatpush.bf16.msra.mxu0 %v448
        %472 = vmatmul.bf16.gmra.mxu0 %v395
        %v473 = vpop.f32.mrf.mxu0
        %v474 = vadd.f32 %v414, %v473
        %v475 = vpop.f32.mrf.mxu0
        %v476 = vadd.f32 %v414, %v475
        %477 = vdwg.mxu0
        %v478 = vadd.f32 %v474, %v348
        %v479 = vadd.f32 %v476, %v349
        %v480 = vsel %vm375, %v478, -inf
        %481 = vmax.xlane.f32.xlu0 %v480
        %v482 = vpop.xlane.xlu0 %481
        %v483 = vsel %vm375, %v479, -inf
        %484 = vmax.xlane.f32.xlu0 %v483
        %v485 = vpop.xlane.xlu0 %484
        %v486 = vsel %vm375, %v478, inf
        %487 = vmin.xlane.f32.xlu0 %v486
        %v488 = vpop.xlane.xlu0 %487
        %v489 = vsel %vm375, %v479, inf
        %490 = vmin.xlane.f32.xlu0 %v489
        %v491 = vpop.xlane.xlu0 %490
        %v492 = vsub.f32 %v478, %v482
        %v493 = vsub.f32 %v479, %v485
        %v494 = vmul.f32 %v492, 1.442695
        %v495 = vpow.pop %v494
        %v496 = vmul.f32 %v493, 1.442695
        %v497 = vpow.pop %v496
        %v498 = vsub.f32 %v488, %v478
        %v499 = vsub.f32 %v491, %v479
        %v500 = vmul.f32 %v498, 1.442695
        %v501 = vpow.pop %v500
        %v502 = vmul.f32 %v499, 1.442695
        %v503 = vpow.pop %v502
        %v504 = vsel %vm375, %v495, 0.0
        %505 = vadd.xlane.f32.xlu0 %v504
        %v506 = vpop.xlane.xlu0 %505
        %v507 = vsel %vm375, %v497, 0.0
        %508 = vadd.xlane.f32.xlu0 %v507
        %v509 = vpop.xlane.xlu0 %508
        %v510 = vrcp.pop %v506
        %v511 = vmul.f32 %v506, %v510
        %v512 = vsub.f32 1.0, %v511
        %v513 = vmul.f32 %v510, %v512
        %v514 = vadd.f32 %v510, %v513
        %vm515 = vweird.f32 %v506
        %vm516 = vweird.f32 %v510
        %vm517 = vmor %vm515, %vm516
        %v518 = vsel %vm517, %v510, %v514
        %v519 = vand.u32 2147483647, %v506
        %vm520 = vcmp.eq.f32.partialorder %v519, 8.507059e+37
        %v521 = vand.u32 %v506, 2147483648
        %v522 = vor.u32 1.1754944e-38, %v521
        %v523 = vsel %vm520, %v522, %v518
        %v524 = vmul.f32 %v495, %v523
        %v525 = vrcp.pop %v509
        %v526 = vmul.f32 %v509, %v525
        %v527 = vsub.f32 1.0, %v526
        %v528 = vmul.f32 %v525, %v527
        %v529 = vadd.f32 %v525, %v528
        %vm530 = vweird.f32 %v509
        %vm531 = vweird.f32 %v525
        %vm532 = vmor %vm530, %vm531
        %v533 = vsel %vm532, %v525, %v529
        %v534 = vand.u32 2147483647, %v509
        %vm535 = vcmp.eq.f32.partialorder %v534, 8.507059e+37
        %v536 = vand.u32 %v509, 2147483648
        %v537 = vor.u32 1.1754944e-38, %v536
        %v538 = vsel %vm535, %v537, %v533
        %v539 = vmul.f32 %v497, %v538
        %v540 = vsel %vm375, %v501, 0.0
        %541 = vadd.xlane.f32.xlu0 %v540
        %v542 = vpop.xlane.xlu0 %541
        %v543 = vsel %vm375, %v503, 0.0
        %544 = vadd.xlane.f32.xlu0 %v543
        %v545 = vpop.xlane.xlu0 %544
        %v546 = vrcp.pop %v542
        %v547 = vmul.f32 %v542, %v546
        %v548 = vsub.f32 1.0, %v547
        %v549 = vmul.f32 %v546, %v548
        %v550 = vadd.f32 %v546, %v549
        %vm551 = vweird.f32 %v542
        %vm552 = vweird.f32 %v546
        %vm553 = vmor %vm551, %vm552
        %v554 = vsel %vm553, %v546, %v550
        %v555 = vand.u32 2147483647, %v542
        %vm556 = vcmp.eq.f32.partialorder %v555, 8.507059e+37
        %v557 = vand.u32 %v542, 2147483648
        %v558 = vor.u32 1.1754944e-38, %v557
        %v559 = vsel %vm556, %v558, %v554
        %v560 = vmul.f32 %v501, %v559
        %v561 = vrcp.pop %v545
        %v562 = vmul.f32 %v545, %v561
        %v563 = vsub.f32 1.0, %v562
        %v564 = vmul.f32 %v561, %v563
        %v565 = vadd.f32 %v561, %v564
        %vm566 = vweird.f32 %v545
        %vm567 = vweird.f32 %v561
        %vm568 = vmor %vm566, %vm567
        %v569 = vsel %vm568, %v561, %v565
        %v570 = vand.u32 2147483647, %v545
        %vm571 = vcmp.eq.f32.partialorder %v570, 8.507059e+37
        %v572 = vand.u32 %v545, 2147483648
        %v573 = vor.u32 1.1754944e-38, %v572
        %v574 = vsel %vm571, %v573, %v569
        %v575 = vmul.f32 %v503, %v574
        %v576 = vmax.f32 %v524, 1e-12
        %v577 = vmax.f32 %v539, 1e-12
        %v578 = vpack.c.bf16 %v576, %v576
        %v579 = vpack.c.bf16 %v577, %v577
        %vm580 = vcmask 257024
        %581 = vst.msk [vmem:[%s313] sm:$0xf] %vm580, %v578
        %582 = vst.msk [vmem:[%s313 + $0x4] sm:$0xf] %vm580, %v579
        %v583 = vmax.f32 %v560, 1e-12
        %v584 = vmax.f32 %v575, 1e-12
        %v585 = vpack.c.bf16 %v583, %v583
        %v586 = vpack.c.bf16 %v584, %v584
        %589 = vrot.lane.b32.xlu0 %v585, 32
        %v590 = vpop.permute.xlu0 %589
        %591 = vrot.lane.b32.xlu0 %v586, 32
        %v592 = vpop.permute.xlu0 %591
        %vm595 = vcmask 519424
        %596 = vst.msk [vmem:[%s313] sm:$0xf] %vm595, %v590
        %597 = vst.msk [vmem:[%s313 + $0x4] sm:$0xf] %vm595, %v592
        %s598 = sand.u32 %s184, 1
        %s599 = scalar_lea.sflag [#allocation3], %s598
        %s600 = sand.u32 %s184, 1
        %s601 = smul.addr %s600, 8
        %s602 = scalar_lea.vmem [#allocation2], %s601
        // Predicated region
        $region41: #{feature_map_forward.1} parent=39 // pred_check
          %p603 = pneg %p194
        $region42: #{feature_map_forward.1} parent=39 // pred_check_branch
          %605 = sbr.rel (%p603) target = $region44
        $region43: #{feature_map_forward.1} parent=39 // pred_region
          %s606 = smul.u32 2, %s26
          %608 = vsyncadd %s599, 0
          %s609 = smul.addr %s24, 2
          %s610 = sadd.s32 %s606, %s609
          %s611 = smul.addr %s25, 8
          %s612 = sadd.s32 %s610, %s611
          %s613 = smul.addr %s612, 4
          %s614 = scalar_lea.hbm %s5, %s613
          %s615 = sshll.u32 %s602, 4
          %s616 = int_to_ptr.vmem [resolvable:$true] %s615
          %s617 = sshll.u32 %s614, 4
          %s618 = int_to_ptr.hbm [resolvable:$true] %s617
          %623 = dma.vmem_to_hbm [thread:$0]  %s616, 128, %s618, %s599, 64, 64, 4
        $region44: #{feature_map_forward.1} parent=39 // pred_fallthru
          _
      $region40: #{feature_map_forward.1} parent=5 // pred_fallthru
        _
      %p624 = scmp.le.s32.totalorder 2, %s14
      // Predicated region
      $region45: #{feature_map_forward.1} parent=5 // pred_check
        %p625 = pneg %p624
      $region46: #{feature_map_forward.1} parent=5 // pred_check_branch
        %627 = sbr.rel (%p625) target = $region48
      $region47: #{feature_map_forward.1} parent=5 // pred_region
        %s628 = ssub.s32 %s14, 2
        // Predicated region
        $region49: #{feature_map_forward.1} parent=47 // pred_check
          %p629 = pneg %p200
        $region50: #{feature_map_forward.1} parent=47 // pred_check_branch
          %631 = sbr.rel (%p629) target = $region52
        $region51: #{feature_map_forward.1} parent=47 // pred_region
          %s632 = sand.u32 %s185, 1
          %s633 = scalar_lea.sflag [#allocation3], %s632
          %s634 = sand.u32 %s185, 1
          %s635 = smul.addr %s634, 8
          %s636 = scalar_lea.vmem [#allocation2], %s635
          %638 = dma.done %s633, 128
        $region52: #{feature_map_forward.1} parent=47 // pred_fallthru
          _
      $region48: #{feature_map_forward.1} parent=5 // pred_fallthru
        _
    $region6: #{feature_map_forward.1} parent=1 // loop_footer
      %s18 = sadd.s32 1, %s14
    $region7: #{feature_map_forward.1} parent=1 // loop_footer_branch
      %13 = sbr.rel target = $region3
    $region8: #{feature_map_forward.1} parent=1 // loop_exit
      _
    %639 = vsyncpa [#allocation3], 1
    %s640 = scalar_lea.sflag [#allocation3], 1
    %641 = vsyncpa %s640, 1

</llo_original>
